<compile_context>
chip_gen: v7x
topology: tpu7x:2x2x1
jax: 0.10.0
libtpu: 0.0.40
codegen_flags: <defaults>
</compile_context>

<pallas_src>
import jax
import jax.numpy as jnp
from jax.experimental import pallas as pl
from jax.experimental.pallas import tpu as pltpu

_VMEM_LIMIT = 32 * 1024 * 1024   # explicit; safe on v5e/v6e (128 MiB) and v7x (64 MiB)
_ROW_TILE_CAP = 1024             # bigger tiles amortize per-step overhead (mem-bound)


def _round_up(n, m):
    return ((n + m - 1) // m) * m


def _pad_rows(x, rows_pad):
    pad = rows_pad - x.shape[0]
    if pad:
        x = jnp.pad(x, ((0, pad),) + ((0, 0),) * (x.ndim - 1))
    return x


def _row_call(kernel, args, tiled, rows, out_cols):
    """Row-tiled pallas_call: tiled args are blocked over rows on a parallel grid
    axis; small weights/biases are pinned resident with a constant index_map so
    they are not re-DMA'd per grid step."""
    tile = min(_ROW_TILE_CAP, _round_up(rows, 8))
    rows_pad = _round_up(rows, tile)
    in_specs, call_args = [], []
    for a, is_tiled in zip(args, tiled):
        if is_tiled:
            a = _pad_rows(a, rows_pad)
            in_specs.append(pl.BlockSpec(
                (tile,) + a.shape[1:],
                lambda i, _nd=a.ndim: (i,) + (0,) * (_nd - 1)))
        else:
            in_specs.append(pl.BlockSpec(
                a.shape, lambda i, _nd=a.ndim: (0,) * _nd))
        call_args.append(a)
    out = pl.pallas_call(
        kernel,
        out_shape=jax.ShapeDtypeStruct((rows_pad, out_cols), jnp.float32),
        grid=(rows_pad // tile,),
        in_specs=in_specs,
        out_specs=pl.BlockSpec((tile, out_cols), lambda i: (i, 0)),
        compiler_params=pltpu.CompilerParams(
            dimension_semantics=("parallel",),
            vmem_limit_bytes=_VMEM_LIMIT),
    )(*call_args)
    return out[:rows]


# --------------------------------------------------------------------------
# Kernel 1: getAttEmb.getFusionAttribute  (flash-style online softmax)
#   sim = cos(emb, att) * adj ; softmax(where(sim!=0, sim, -9e15)) @ att
# Inputs: emb pre-normalized bf16; att raw bf16 + [1, ti] f32 inverse norms
# (column scale); adj bf16.  All per-row normalization / casting is hoisted
# out of the inner kv loop.
# --------------------------------------------------------------------------
def fusion_att_kernel(emb_ref, att_ref, inv_ref, adj_ref, fill_ref, out_ref,
                      m_sc, l_sc, acc_sc):
    j = pl.program_id(1)

    @pl.when(j == 0)
    def _():
        m_sc[...] = jnp.full_like(m_sc, -jnp.inf)
        l_sc[...] = jnp.zeros_like(l_sc)
        acc_sc[...] = jnp.zeros_like(acc_sc)

    # [TU, TI] = normalized-emb  x  raw-att^T, then scale columns by 1/|att_row|
    raw = jax.lax.dot_general(
        emb_ref[...], att_ref[...],
        (((1,), (1,)), ((), ())), preferred_element_type=jnp.float32)
    sim = raw * inv_ref[...] * adj_ref[...]                     # [TU, TI] f32
    # fill = -9e15 on real columns (reference quirk), -1e30 on padded columns
    logits = jnp.where(sim != 0.0, sim, fill_ref[...])

    m_prev = m_sc[...]
    m_new = jnp.maximum(m_prev, jnp.max(logits, axis=1, keepdims=True))
    alpha = jnp.exp(m_prev - m_new)
    p = jnp.exp(logits - m_new)
    l_sc[...] = alpha * l_sc[...] + jnp.sum(p, axis=1, keepdims=True)
    acc_sc[...] = alpha * acc_sc[...] + jnp.dot(
        p.astype(jnp.bfloat16), att_ref[...], preferred_element_type=jnp.float32)
    m_sc[...] = m_new

    @pl.when(j == pl.num_programs(1) - 1)
    def _():
        out_ref[...] = acc_sc[...] / l_sc[...]


def fusion_attribute(emb, att, adj):
    u, d = emb.shape
    n_cols = att.shape[0]
    tu = min(_ROW_TILE_CAP, _round_up(u, 8))
    ti = min(_ROW_TILE_CAP, _round_up(n_cols, 128))
    u_pad = _round_up(u, tu)
    i_pad = _round_up(n_cols, ti)

    # hoisted row-normalization (f32), then bf16 for the kernel streams
    emb_n = emb * jax.lax.rsqrt(
        jnp.maximum(jnp.sum(emb * emb, axis=1, keepdims=True), 1e-24))
    att_inv = jax.lax.rsqrt(
        jnp.maximum(jnp.sum(att * att, axis=1, keepdims=True), 1e-24))   # [n_cols,1]

    emb_p = _pad_rows(emb_n, u_pad).astype(jnp.bfloat16)
    att_p = _pad_rows(att, i_pad).astype(jnp.bfloat16)
    inv_row = jnp.pad(att_inv.T, ((0, 0), (0, i_pad - n_cols)))         # [1, i_pad] f32
    adj_p = jnp.pad(adj, ((0, u_pad - u), (0, i_pad - n_cols))).astype(jnp.bfloat16)
    fill = jnp.where(jnp.arange(i_pad)[None, :] < n_cols,
                     -9e15, -1e30).astype(jnp.float32)                  # [1, i_pad]

    out = pl.pallas_call(
        fusion_att_kernel,
        out_shape=jax.ShapeDtypeStruct((u_pad, d), jnp.float32),
        grid=(u_pad // tu, i_pad // ti),
        in_specs=[
            pl.BlockSpec((tu, d), lambda i, j: (i, 0)),
            pl.BlockSpec((ti, d), lambda i, j: (j, 0)),
            pl.BlockSpec((1, ti), lambda i, j: (0, j)),
            pl.BlockSpec((tu, ti), lambda i, j: (i, j)),
            pl.BlockSpec((1, ti), lambda i, j: (0, j)),
        ],
        out_specs=pl.BlockSpec((tu, d), lambda i, j: (i, 0)),
        scratch_shapes=[pltpu.VMEM((tu, 1), jnp.float32),
                        pltpu.VMEM((tu, 1), jnp.float32),
                        pltpu.VMEM((tu, d), jnp.float32)],
        compiler_params=pltpu.CompilerParams(
            dimension_semantics=("parallel", "arbitrary"),
            vmem_limit_bytes=_VMEM_LIMIT),
    )(emb_p, att_p, inv_row, adj_p, fill)
    return out[:u]


# --------------------------------------------------------------------------
# Kernel 2: inner_GNN.message  (pure VPU: no K=1 MXU matmuls)
# --------------------------------------------------------------------------
def edge_message_kernel(xi_ref, xj_ref, w1_ref, b1_ref, w2t_ref, b2_ref, out_ref):
    p = xi_ref[...] * xj_ref[...]                              # [TE, D]
    gap = jnp.mean(p, axis=1, keepdims=True)                   # [TE, 1]
    h = jnp.maximum(gap * w1_ref[...] + b1_ref[...], 0.0)      # [TE, H] broadcast
    s = jax.nn.sigmoid(
        jnp.sum(h * w2t_ref[...], axis=1, keepdims=True) + b2_ref[...])  # [TE,1]
    out_ref[...] = (s + 1.0) * p


def edge_messages(x_i, x_j, w1, b1, w2, b2):
    return _row_call(edge_message_kernel,
                     [x_i, x_j, w1, b1, w2.T, b2],
                     [True, True, False, False, False, False],
                     x_i.shape[0], x_i.shape[1])


# --------------------------------------------------------------------------
# Kernel 3: bilinear combine, reassociated
#   (inner @ outer^T) @ node  ==  inner @ (outer^T @ node)   (kills [M,M] temp)
# outer^T @ node: accumulate straight into the resident output block (no
# scratch/copy); leading parallel split axis so v7x can use both TensorCores.
# --------------------------------------------------------------------------
def outer_t_node_kernel(outer_ref, node_ref, out_ref):
    @pl.when(pl.program_id(1) == 0)
    def _():
        out_ref[...] = jnp.zeros_like(out_ref)

    partial = jax.lax.dot_general(
        outer_ref[...].astype(jnp.bfloat16), node_ref[...].astype(jnp.bfloat16),
        (((0,), (0,)), ((), ())), preferred_element_type=jnp.float32)   # [D, D]
    out_ref[...] += partial[None, :, :]


def outer_t_node(outer, node, n_split=2):
    m, d = outer.shape
    tm = min(_ROW_TILE_CAP, _round_up(m, 8))
    m_pad = _round_up(m, tm * n_split)
    tiles_per_split = m_pad // (tm * n_split)
    out = pl.pallas_call(
        outer_t_node_kernel,
        out_shape=jax.ShapeDtypeStruct((n_split, d, d), jnp.float32),
        grid=(n_split, tiles_per_split),
        in_specs=[
            pl.BlockSpec((tm, d), lambda s, i, _t=tiles_per_split: (s * _t + i, 0)),
            pl.BlockSpec((tm, d), lambda s, i, _t=tiles_per_split: (s * _t + i, 0)),
        ],
        out_specs=pl.BlockSpec((1, d, d), lambda s, i: (s, 0, 0)),
        compiler_params=pltpu.CompilerParams(
            dimension_semantics=("parallel", "arbitrary"),
            vmem_limit_bytes=_VMEM_LIMIT),
    )(_pad_rows(outer, m_pad), _pad_rows(node, m_pad))
    return out.sum(axis=0)                                     # [D, D] f32


def combine_rows_kernel(inner_ref, bls_ref, t_ref, w_ref, b_ref, out_ref):
    # Linear(1, D) as a VPU broadcast (no K=1 matmul)
    lin = bls_ref[...] * w_ref[...] + b_ref[...]               # [TM, D]
    out2 = jnp.dot(inner_ref[...].astype(jnp.bfloat16), t_ref[...],
                   preferred_element_type=jnp.float32)         # [TM, D]
    out_ref[...] = lin * out2


def combine(inner, outer, node, bls_col, w, b):
    # pre-cast the resident [D,D] matrix once (not per grid step)
    t = outer_t_node(outer, node).astype(jnp.bfloat16)
    return _row_call(combine_rows_kernel,
                     [inner, bls_col, t, w, b],
                     [True, True, False, False, False],
                     inner.shape[0], inner.shape[1])


# --------------------------------------------------------------------------
# Kernel 4: 2-step GRU (PyTorch convention, gates r|z|n stacked along the
# lane axis: weights [D, 3D], biases [1, 3D]).  One [TM,128]x[128,384] matmul
# per operand per step fills the 256-wide MXU on v6e/v7x; gate slices land on
# lane-aligned 128 boundaries.  Weights arrive pre-cast to bf16.
# --------------------------------------------------------------------------
def gru_kernel(x0_ref, x1_ref, h0_ref, wih_ref, whh_ref, bih_ref, bhh_ref, out_ref):
    d = out_ref.shape[1]
    wih = wih_ref[...]                         # [D, 3D] bf16 (resident)
    whh = whh_ref[...]
    bih = bih_ref[...]                         # [1, 3D] f32
    bhh = bhh_ref[...]

    def step(x, h):
        # both matmuls share the same [TM, 3D] f32 accumulator shape
        gi = jnp.dot(x.astype(jnp.bfloat16), wih,
                     preferred_element_type=jnp.float32) + bih     # [TM, 3D]
        gh = jnp.dot(h.astype(jnp.bfloat16), whh,
                     preferred_element_type=jnp.float32) + bhh     # [TM, 3D]
        i_r, i_z, i_n = gi[:, :d], gi[:, d:2 * d], gi[:, 2 * d:]
        h_r, h_z, h_n = gh[:, :d], gh[:, d:2 * d], gh[:, 2 * d:]
        r = jax.nn.sigmoid(i_r + h_r)
        z = jax.nn.sigmoid(i_z + h_z)
        n = jnp.tanh(i_n + r * h_n)
        return (1.0 - z) * n + z * h

    h = step(x0_ref[...], h0_ref[...])
    h = step(x1_ref[...], h)
    out_ref[...] = h


def gru_update(x0, x1, h0, wih, whh, bih, bhh):
    return _row_call(gru_kernel,
                     [x0, x1, h0,
                      wih.astype(jnp.bfloat16), whh.astype(jnp.bfloat16),
                      bih, bhh],
                     [True, True, True, False, False, False, False],
                     h0.shape[0], h0.shape[1])


# --------------------------------------------------------------------------
# Parameter initialization (deterministic, matches shapes in __init__)
# --------------------------------------------------------------------------
def init_params(key, n_features, dim, hidden, num_users, num_items):
    ks = jax.random.split(key, 12)
    p = {}
    p["feature_embedding"] = jax.random.normal(ks[0], (n_features + 1, dim))
    p["node_weight"] = 0.01 * jax.random.normal(ks[1], (n_features + 1, 1))
    # inner_GNN MLP  (lin1: 1->hidden, lin2: hidden->1), stored pre-transposed
    p["gnn_w1"] = 0.1 * jax.random.normal(ks[2], (1, hidden))
    p["gnn_b1"] = jnp.zeros((1, hidden))
    p["gnn_w2"] = 0.1 * jax.random.normal(ks[3], (hidden, 1))
    p["gnn_b2"] = jnp.zeros((1, 1))
    # getAttEmb embeddings, std=0.1
    p["user_embedding"] = 0.1 * jax.random.normal(ks[4], (num_users, dim))
    p["item_embedding"] = 0.1 * jax.random.normal(ks[5], (num_items, dim))
    # GRU gates stacked along the lane axis: [D, 3D] (columns = r|z|n) so the
    # kernel does one wide matmul per operand and slices at 128-lane boundaries.
    p["gru_wih"] = 0.1 * jax.random.normal(ks[6], (dim, 3 * dim))
    p["gru_whh"] = 0.1 * jax.random.normal(ks[7], (dim, 3 * dim))
    p["gru_bih"] = jnp.zeros((1, 3 * dim))
    p["gru_bhh"] = jnp.zeros((1, 3 * dim))
    # model-level lin1: Linear(1, dim)  (stored as [1, D] + bias [1, D])
    p["lin1_w"] = 0.1 * jax.random.normal(ks[8], (1, dim))
    p["lin1_b"] = jnp.zeros((1, dim))
    # self.g = Linear(dim, 1, bias=False) is defined but unused in forward.
    return jax.tree.map(lambda x: x.astype(jnp.float32), p)


# --------------------------------------------------------------------------
# BLS placeholder
# TODO(synk): the BLS class is not provided in the reference code; using a
# deterministic masked-mean-over-dim reduction with matching output shape.
# --------------------------------------------------------------------------
def bls_fit(x, mask):
    D = x.shape[-1]
    out = jnp.sum(x * mask, axis=-1) / D
    return out.reshape(-1, 1)


# --------------------------------------------------------------------------
# Full forward (eager glue; Pallas kernels carry the heavy compute)
# --------------------------------------------------------------------------
def gnn_aa_forward(params, data, gru_key):
    node_id = data["node_id"]              # [N, 1] int32
    batch = data["batch"]                  # [N] int32
    edge_index = data["edge_index"]        # [2, E] int32
    user_att = data["user_att_net"]        # [num_users, num_items] f32
    item_att = data["item_att_net"]        # [num_items, num_users] f32
    nuf = data["num_user_features"]
    bs = data["batch_size"]

    N = node_id.shape[0]
    D = params["feature_embedding"].shape[1]

    # node weights + sum per graph (global_add_pool)
    node_w = params["node_weight"][node_id[:, 0], 0]                  # [N]
    sum_weight = jax.ops.segment_sum(node_w, batch, num_segments=bs)  # [bs]

    # feature embedding
    node_emb = params["feature_embedding"][node_id[:, 0]]             # [N, D]

    # ---------------- inner GNN (message passing, aggr='add') -------------
    # TODO(synk): for real-sized graphs fuse this gather into the edge-message
    # kernel via scalar-prefetched src/dst indices instead of materializing
    # x_i/x_j in HBM; at demo sizes the plain-JAX gather is negligible.
    src, dst = edge_index[0], edge_index[1]
    x_j = node_emb[src]
    x_i = node_emb[dst]
    msgs = edge_messages(x_i, x_j, params["gnn_w1"], params["gnn_b1"],
                         params["gnn_w2"], params["gnn_b2"])          # [E, D]
    inner_node_message = jax.ops.segment_sum(msgs, dst, num_segments=N)

    # ---------------- getAttEmb -------------------------------------------
    users_emb = params["user_embedding"]
    items_emb = params["item_embedding"]
    out_useratt_emb = fusion_attribute(users_emb, items_emb, user_att)
    out_itematt_emb = fusion_attribute(items_emb, users_emb, item_att)

    # ---------------- connect ----------------------------------------------
    num_users = users_emb.shape[0]
    num_items = items_emb.shape[0]
    nif = num_items // bs  # uniform item count per graph in this demo
    user_message = out_useratt_emb * users_emb
    item_message = out_itematt_emb * items_emb
    outer_node_message = jnp.concatenate(
        [user_message.reshape(bs, nuf, D),
         item_message.reshape(bs, nif, D)], axis=1).reshape(N, D)

    # ---------------- split_batch ------------------------------------------
    ones = jnp.ones_like(batch)
    nodes_per_graph = jax.ops.segment_sum(ones, batch, num_segments=bs)
    cum = jnp.concatenate(
        [jnp.zeros((1,), jnp.int32),
         jnp.cumsum(nodes_per_graph)[:-1].astype(jnp.int32)])
    multi_hot = jnp.concatenate([cum + i for i in range(nuf)])
    test = jnp.sum(jax.nn.one_hot(multi_hot, N, dtype=jnp.int32), axis=0) * bs
    new_batch = batch + test
    user_mask = (new_batch >= bs) & (new_batch <= 2 * bs - 1)
    item_mask = (new_batch >= 0) & (new_batch <= bs - 1)
    user_idx = jnp.where(user_mask)[0]
    item_idx = jnp.where(item_mask)[0]

    inner_user_node = inner_node_message[user_idx]
    inner_item_node = inner_node_message[item_idx]
    outer_user_node = outer_node_message[user_idx]
    outer_item_node = outer_node_message[item_idx]
    node_user = node_emb[user_idx]
    node_item = node_emb[item_idx]

    re_inner_user = inner_user_node.reshape(bs, -1, D)
    re_outer_user = outer_user_node.reshape(bs, -1, D)

    num_item_list = [int((new_batch == i).sum()) for i in range(bs)]
    max_num_item = max(num_item_list)
    inner_item_pad = jnp.zeros((bs, max_num_item, D))
    outer_item_pad = jnp.zeros((bs, max_num_item, D))
    item_masks = jnp.ones((bs, max_num_item, D))
    cur = 0
    for i in range(bs):
        n_i = num_item_list[i]
        inner_item_pad = inner_item_pad.at[i, :n_i].set(
            inner_item_node[cur:cur + n_i])
        outer_item_pad = outer_item_pad.at[i, :n_i].set(
            outer_item_node[cur:cur + n_i])
        item_masks = item_masks.at[i, n_i:].set(0.0)
        cur += n_i

    sum_user_features = re_inner_user + re_outer_user
    sum_item_features = inner_item_pad + outer_item_pad

    # BLS.fit (placeholder) -> [M, 1]; lin1 + reassociated bilinear in kernels
    out_user_bls = bls_fit(sum_user_features, jnp.ones_like(sum_user_features))
    out_item_bls = bls_fit(sum_item_features, item_masks)

    combined_user = combine(inner_user_node, outer_user_node, node_user,
                            out_user_bls, params["lin1_w"], params["lin1_b"])
    combined_item = combine(inner_item_node, outer_item_node, node_item,
                            out_item_bls, params["lin1_w"], params["lin1_b"])

    combined_node = jnp.zeros((N, D))
    combined_node = combined_node.at[user_idx].set(combined_user)
    combined_node = combined_node.at[item_idx].set(combined_item)

    # ---------------- GRU update (seq = [node_emb, combined_node]) ---------
    h0 = 0.01 * jax.random.normal(gru_key, (N, D), dtype=jnp.float32)
    updated_node = gru_update(node_emb, combined_node, h0,
                              params["gru_wih"], params["gru_whh"],
                              params["gru_bih"], params["gru_bhh"])

    # ---------------- readout ----------------------------------------------
    seg_sum = jax.ops.segment_sum(updated_node, new_batch, num_segments=2 * bs)
    counts = jax.ops.segment_sum(jnp.ones((N,)), new_batch, num_segments=2 * bs)
    updated_graph = seg_sum / jnp.maximum(counts[:, None], 1.0)
    item_graphs = updated_graph[:bs]
    user_graphs = updated_graph[bs:]
    y = jax.nn.sigmoid(
        jnp.sum(user_graphs * item_graphs, axis=1) + sum_weight)[:, None]
    return y


# --------------------------------------------------------------------------
# main
# --------------------------------------------------------------------------
if __name__ == "__main__":
    key = jax.random.PRNGKey(0)
    k_param, k_id, k_uadj, k_iadj, k_uval, k_ival, k_gru = jax.random.split(key, 7)

    # small deterministic problem; dim=128 keeps every tensor lane-dense
    dim = 128
    hidden = 16
    batch_size = 2
    num_user_features = 2
    num_item_features = 3            # uniform item count per graph
    nodes_per_graph = num_user_features + num_item_features
    N = batch_size * nodes_per_graph
    n_features = 20
    num_users = num_user_features * batch_size     # 4
    num_items = N - num_users                      # 6

    node_id = jax.random.randint(k_id, (N, 1), 0, n_features + 1, dtype=jnp.int32)
    batch = jnp.repeat(jnp.arange(batch_size, dtype=jnp.int32), nodes_per_graph)

    # fully connected directed edges within each graph (no self loops)
    edges = []
    for g in range(batch_size):
        base = g * nodes_per_graph
        for s in range(nodes_per_graph):
            for t in range(nodes_per_graph):
                if s != t:
                    edges.append((base + s, base + t))
    edge_index = jnp.asarray(edges, dtype=jnp.int32).T                 # [2, E]

    # dense attribute adjacency nets (stand-in for SparseTensor.to_dense())
    u_mask = (jax.random.uniform(k_uadj, (num_users, num_items)) > 0.5)
    i_mask = (jax.random.uniform(k_iadj, (num_items, num_users)) > 0.5)
    user_att_net = (u_mask * jax.random.uniform(k_uval, (num_users, num_items))
                    ).astype(jnp.float32)
    item_att_net = (i_mask * jax.random.uniform(k_ival, (num_items, num_users))
                    ).astype(jnp.float32)

    params = init_params(k_param, n_features, dim, hidden, num_users, num_items)

    data = {
        "node_id": node_id,
        "batch": batch,
        "edge_index": edge_index,
        "user_att_net": user_att_net,
        "item_att_net": item_att_net,
        "num_user_features": num_user_features,
        "batch_size": batch_size,
    }

    y = gnn_aa_forward(params, data, k_gru)
    jax.block_until_ready(y)
    assert y.shape == (batch_size, 1)
    assert bool(jnp.all(jnp.isfinite(y)))
    print("KERNEL_OK")
</pallas_src>

<mosaic_0001>
module attributes {stable_mosaic.version = 11 : i64} {
  func.func @edge_message_kernel(%arg0: i32, %arg1: memref<40x128xf32, #tpu.memory_space<vmem>>, %arg2: memref<40x128xf32, #tpu.memory_space<vmem>>, %arg3: memref<1x16xf32, #tpu.memory_space<vmem>>, %arg4: memref<1x16xf32, #tpu.memory_space<vmem>>, %arg5: memref<1x16xf32, #tpu.memory_space<vmem>>, %arg6: memref<1x1xf32, #tpu.memory_space<vmem>>, %arg7: memref<40x128xf32, #tpu.memory_space<vmem>>) attributes {dimension_semantics = [#tpu.dimension_semantics<parallel>], iteration_bounds = array<i64: 1>, scalar_prefetch = 0 : i64, scratch_operands = 0 : i64, tpu.core_type = #tpu.core_type<tc>, window_params = [{transform_indices = @transform_0, window_bounds = array<i64: 40, 128>}, {transform_indices = @transform_1, window_bounds = array<i64: 40, 128>}, {pipeline_mode = #tpu.pipeline_mode<synchronous>, transform_indices = @transform_2, window_bounds = array<i64: 1, 16>}, {pipeline_mode = #tpu.pipeline_mode<synchronous>, transform_indices = @transform_3, window_bounds = array<i64: 1, 16>}, {pipeline_mode = #tpu.pipeline_mode<synchronous>, transform_indices = @transform_4, window_bounds = array<i64: 1, 16>}, {pipeline_mode = #tpu.pipeline_mode<synchronous>, transform_indices = @transform_5, window_bounds = array<i64: 1, 1>}, {transform_indices = @transform_6, window_bounds = array<i64: 40, 128>}]} {
    %c0 = arith.constant 0 : index
    %c0_0 = arith.constant 0 : index
    %0 = vector.load %arg1[%c0, %c0_0] : memref<40x128xf32, #tpu.memory_space<vmem>>, vector<40x128xf32>
    %c0_1 = arith.constant 0 : index
    %c0_2 = arith.constant 0 : index
    %1 = vector.load %arg2[%c0_1, %c0_2] : memref<40x128xf32, #tpu.memory_space<vmem>>, vector<40x128xf32>
    %2 = arith.mulf %0, %1 : vector<40x128xf32>
    %cst = arith.constant dense<0.000000e+00> : vector<40xf32>
    %3 = vector.multi_reduction <add>, %2, %cst [1] : vector<40x128xf32> to vector<40xf32>
    %4 = vector.shape_cast %3 : vector<40xf32> to vector<40x1xf32>
    %cst_3 = arith.constant 1.280000e+02 : f32
    %5 = vector.broadcast %cst_3 : f32 to vector<40x1xf32>
    %6 = arith.divf %4, %5 : vector<40x1xf32>
    %c0_4 = arith.constant 0 : index
    %c0_5 = arith.constant 0 : index
    %7 = vector.load %arg3[%c0_4, %c0_5] : memref<1x16xf32, #tpu.memory_space<vmem>>, vector<1x16xf32>
    %8 = vector.broadcast %6 : vector<40x1xf32> to vector<40x16xf32>
    %9 = vector.broadcast %7 : vector<1x16xf32> to vector<40x16xf32>
    %10 = arith.mulf %8, %9 : vector<40x16xf32>
    %c0_6 = arith.constant 0 : index
    %c0_7 = arith.constant 0 : index
    %11 = vector.load %arg4[%c0_6, %c0_7] : memref<1x16xf32, #tpu.memory_space<vmem>>, vector<1x16xf32>
    %12 = vector.broadcast %11 : vector<1x16xf32> to vector<40x16xf32>
    %13 = arith.addf %10, %12 : vector<40x16xf32>
    %cst_8 = arith.constant 0.000000e+00 : f32
    %14 = vector.broadcast %cst_8 : f32 to vector<40x16xf32>
    %15 = arith.maximumf %13, %14 : vector<40x16xf32>
    %c0_9 = arith.constant 0 : index
    %c0_10 = arith.constant 0 : index
    %16 = vector.load %arg5[%c0_9, %c0_10] : memref<1x16xf32, #tpu.memory_space<vmem>>, vector<1x16xf32>
    %17 = vector.broadcast %16 : vector<1x16xf32> to vector<40x16xf32>
    %18 = arith.mulf %15, %17 : vector<40x16xf32>
    %cst_11 = arith.constant dense<0.000000e+00> : vector<40xf32>
    %19 = vector.multi_reduction <add>, %18, %cst_11 [1] : vector<40x16xf32> to vector<40xf32>
    %20 = vector.shape_cast %19 : vector<40xf32> to vector<40x1xf32>
    %c0_12 = arith.constant 0 : index
    %c0_13 = arith.constant 0 : index
    %21 = vector.load %arg6[%c0_12, %c0_13] : memref<1x1xf32, #tpu.memory_space<vmem>>, vector<1x1xf32>
    %22 = vector.broadcast %21 : vector<1x1xf32> to vector<40x1xf32>
    %23 = arith.addf %20, %22 : vector<40x1xf32>
    %24 = arith.negf %23 : vector<40x1xf32>
    %25 = math.exp %24 : vector<40x1xf32>
    %cst_14 = arith.constant 1.000000e+00 : f32
    %26 = vector.broadcast %cst_14 : f32 to vector<40x1xf32>
    %27 = arith.addf %26, %25 : vector<40x1xf32>
    %28 = arith.divf %26, %27 : vector<40x1xf32>
    %cst_15 = arith.constant 1.000000e+00 : f32
    %29 = vector.broadcast %cst_15 : f32 to vector<40x1xf32>
    %30 = arith.addf %28, %29 : vector<40x1xf32>
    %31 = vector.broadcast %30 : vector<40x1xf32> to vector<40x128xf32>
    %32 = arith.mulf %31, %2 : vector<40x128xf32>
    %c0_16 = arith.constant 0 : index
    %c0_17 = arith.constant 0 : index
    %33 = vector.load %arg7[%c0_16, %c0_17] : memref<40x128xf32, #tpu.memory_space<vmem>>, vector<40x128xf32>
    tpu.vector_store %arg7[%c0_16, %c0_17], %32 {strides = array<i32>} : memref<40x128xf32, #tpu.memory_space<vmem>>, vector<40x128xf32>,
    return
  }
  func.func @transform_0(%arg0: i32) -> (i32, i32) {
    %c0_i32 = arith.constant 0 : i32
    %c0_i32_0 = arith.constant 0 : i32
    return %arg0, %c0_i32 : i32, i32
  }
  func.func @transform_1(%arg0: i32) -> (i32, i32) {
    %c0_i32 = arith.constant 0 : i32
    %c0_i32_0 = arith.constant 0 : i32
    return %arg0, %c0_i32 : i32, i32
  }
  func.func @transform_2(%arg0: i32) -> (i32, i32) {
    %c0_i32 = arith.constant 0 : i32
    %c0_i32_0 = arith.constant 0 : i32
    %c0_i32_1 = arith.constant 0 : i32
    return %c0_i32, %c0_i32_0 : i32, i32
  }
  func.func @transform_3(%arg0: i32) -> (i32, i32) {
    %c0_i32 = arith.constant 0 : i32
    %c0_i32_0 = arith.constant 0 : i32
    %c0_i32_1 = arith.constant 0 : i32
    return %c0_i32, %c0_i32_0 : i32, i32
  }
  func.func @transform_4(%arg0: i32) -> (i32, i32) {
    %c0_i32 = arith.constant 0 : i32
    %c0_i32_0 = arith.constant 0 : i32
    %c0_i32_1 = arith.constant 0 : i32
    return %c0_i32, %c0_i32_0 : i32, i32
  }
  func.func @transform_5(%arg0: i32) -> (i32, i32) {
    %c0_i32 = arith.constant 0 : i32
    %c0_i32_0 = arith.constant 0 : i32
    %c0_i32_1 = arith.constant 0 : i32
    return %c0_i32, %c0_i32_0 : i32, i32
  }
  func.func @transform_6(%arg0: i32) -> (i32, i32) {
    %c0_i32 = arith.constant 0 : i32
    %c0_i32_0 = arith.constant 0 : i32
    return %arg0, %c0_i32 : i32, i32
  }
}

</mosaic_0001>

<llo_original>
// kernel: tpu_custom_call.1
$region0: #{tpu_custom_call.1}
  #allocation0 [shape = 'u32[]', space=smem, size = 0x4, offset = 0x4, fixed_abs, tag = 'smem constant byte address 0x4 - core index']
  #allocation1 [shape = 'u32[144,128]{1,0:T(1,128)}', space=vmem, size = 0x12000, scoped, tag = 'internal scratch']
  #allocation2 [shape = 'f32[1,1]{1,0:T(1,128)S(1)}', space=vmem, size = 0x200, scoped, tag = 'scoped memory for tpu_custom_call.1']
  %s0 = inlined_call_operand.hbm [shape: f32[40,128], index: 0, kind: input, shape index: {}]
  %s1 = inlined_call_operand.hbm [shape: f32[40,128], index: 1, kind: input, shape index: {}]
  %s2 = inlined_call_operand.vmem [shape: f32[1,16], index: 2, kind: input, shape index: {}]
  %s3 = inlined_call_operand.vmem [shape: f32[1,16], index: 3, kind: input, shape index: {}]
  %s4 = inlined_call_operand.vmem [shape: f32[1,16], index: 4, kind: input, shape index: {}]
  %s5 = inlined_call_operand.<no memory space> [shape: f32[1,1], index: 5, kind: input, shape index: {}]
  %s6 = inlined_call_operand.hbm [shape: f32[40,128], index: 6, kind: output, shape index: {}]
  %s7 = sld [smem:[#allocation0]]
  $region42: #{tpu_custom_call.1} parent=0
    _
  %s9 = ssub.s32 1, %s7
  %s10 = scalar_select 0, %s9, %s7
  %v11 = vstv %s5
  %12 = vst [vmem:[#allocation2] sm:$0x1] %v11
  $region1: #{tpu_custom_call.1} parent=0
    #allocation3 [shape = 'u8[20480]{0}', space=vmem, size = 0x5000, scoped, tag = 'input window, operand 0, single buffered']
    #allocation4 [shape = 's32[1]{0}', space=sflag, size = 0x4, scoped, tag = 'scoped memory for tpu_custom_call.1']
    #allocation5 [shape = 's32[1]{0}', space=sflag, size = 0x4, scoped, tag = 'scoped memory for tpu_custom_call.1']
    #allocation6 [shape = 'u8[20480]{0}', space=vmem, size = 0x5000, scoped, tag = 'input window, operand 1, single buffered']
    #allocation7 [shape = 's32[1]{0}', space=sflag, size = 0x4, scoped, tag = 'scoped memory for tpu_custom_call.1']
    #allocation8 [shape = 'u8[20480]{0}', space=vmem, size = 0x5000, scoped, tag = 'output window, operand 0, single buffered']
    %13 = vsyncpa [#allocation4], 0
    %14 = vsyncpa [#allocation7], 0
    %15 = vsyncpa [#allocation5], 0
    // Predicated region
    $region2: #{tpu_custom_call.1} parent=1 // pred_check
      _
    $region3: #{tpu_custom_call.1} parent=1 // pred_check_branch
      %17 = sbr.rel (0) target = $region5
    $region4: #{tpu_custom_call.1} parent=1 // pred_region
      %s19 = ssub.s32 640, 640
      %20 = vsyncadd [#allocation4], %s19
      %s21 = sshll.u32 [#allocation3], 4
      %s22 = int_to_ptr.vmem [resolvable:$true] %s21
      %27 = dma.hbm_to_vmem [thread:$0]  %s0, 640, %s22, [#allocation4], 128, 128, 8
    $region5: #{tpu_custom_call.1} parent=1 // pred_fallthru
      _
    // Predicated region
    $region6: #{tpu_custom_call.1} parent=1 // pred_check
      _
    $region7: #{tpu_custom_call.1} parent=1 // pred_check_branch
      %29 = sbr.rel (0) target = $region9
    $region8: #{tpu_custom_call.1} parent=1 // pred_region
      %s31 = ssub.s32 640, 640
      %32 = vsyncadd [#allocation7], %s31
      %s33 = sshll.u32 [#allocation6], 4
      %s34 = int_to_ptr.vmem [resolvable:$true] %s33
      %39 = dma.hbm_to_vmem [thread:$0]  %s1, 640, %s34, [#allocation7], 128, 128, 8
    $region9: #{tpu_custom_call.1} parent=1 // pred_fallthru
      _
    // Predicated region
    $region10: #{tpu_custom_call.1} parent=1 // pred_check
      _
    $region11: #{tpu_custom_call.1} parent=1 // pred_check_branch
      %41 = sbr.rel (0) target = $region13
    $region12: #{tpu_custom_call.1} parent=1 // pred_region
      _
    $region13: #{tpu_custom_call.1} parent=1 // pred_fallthru
      _
    // Predicated region
    $region14: #{tpu_custom_call.1} parent=1 // pred_check
      _
    $region15: #{tpu_custom_call.1} parent=1 // pred_check_branch
      %43 = sbr.rel (0) target = $region17
    $region16: #{tpu_custom_call.1} parent=1 // pred_region
      _
    $region17: #{tpu_custom_call.1} parent=1 // pred_fallthru
      _
    // Predicated region
    $region18: #{tpu_custom_call.1} parent=1 // pred_check
      _
    $region19: #{tpu_custom_call.1} parent=1 // pred_check_branch
      %45 = sbr.rel (0) target = $region21
    $region20: #{tpu_custom_call.1} parent=1 // pred_region
      _
    $region21: #{tpu_custom_call.1} parent=1 // pred_fallthru
      _
    // Predicated region
    $region22: #{tpu_custom_call.1} parent=1 // pred_check
      _
    $region23: #{tpu_custom_call.1} parent=1 // pred_check_branch
      %47 = sbr.rel (0) target = $region25
    $region24: #{tpu_custom_call.1} parent=1 // pred_region
      _
    $region25: #{tpu_custom_call.1} parent=1 // pred_fallthru
      _
    // Predicated region
    $region26: #{tpu_custom_call.1} parent=1 // pred_check
      _
    $region27: #{tpu_custom_call.1} parent=1 // pred_check_branch
      %49 = sbr.rel (0) target = $region29
    $region28: #{tpu_custom_call.1} parent=1 // pred_region
      %50 = dma.done [#allocation4], 640
    $region29: #{tpu_custom_call.1} parent=1 // pred_fallthru
      _
    // Predicated region
    $region30: #{tpu_custom_call.1} parent=1 // pred_check
      _
    $region31: #{tpu_custom_call.1} parent=1 // pred_check_branch
      %52 = sbr.rel (0) target = $region33
    $region32: #{tpu_custom_call.1} parent=1 // pred_region
      %53 = dma.done [#allocation7], 640
    $region33: #{tpu_custom_call.1} parent=1 // pred_fallthru
      _
    %v54 = vld [vmem:[#allocation3] sm:$0xff]
    %v55 = vld [vmem:[#allocation3 + $0x8] sm:$0xff]
    %v56 = vld [vmem:[#allocation3 + $0x10] sm:$0xff]
    %v57 = vld [vmem:[#allocation3 + $0x18] sm:$0xff]
    %v58 = vld [vmem:[#allocation3 + $0x20] sm:$0xff]
    %v59 = vld [vmem:[#allocation6] sm:$0xff]
    %v60 = vld [vmem:[#allocation6 + $0x8] sm:$0xff]
    %v61 = vld [vmem:[#allocation6 + $0x10] sm:$0xff]
    %v62 = vld [vmem:[#allocation6 + $0x18] sm:$0xff]
    %v63 = vld [vmem:[#allocation6 + $0x20] sm:$0xff]
    %v64 = vmul.f32 %v54, %v59
    %v65 = vmul.f32 %v55, %v60
    %v66 = vmul.f32 %v56, %v61
    %v67 = vmul.f32 %v57, %v62
    %v68 = vmul.f32 %v58, %v63
    %69 = vadd.xlane.f32.xlu0 %v64
    %v70 = vpop.xlane.xlu0 %69
    %71 = vadd.xlane.f32.xlu0 %v65
    %v72 = vpop.xlane.xlu0 %71
    %73 = vadd.xlane.f32.xlu0 %v66
    %v74 = vpop.xlane.xlu0 %73
    %75 = vadd.xlane.f32.xlu0 %v67
    %v76 = vpop.xlane.xlu0 %75
    %77 = vadd.xlane.f32.xlu0 %v68
    %v78 = vpop.xlane.xlu0 %77
    %v79 = vrcp.pop 128.0
    %v80 = vmul.f32 %v70, %v79
    %v81 = vmul.f32 %v72, %v79
    %v82 = vmul.f32 %v74, %v79
    %v83 = vmul.f32 %v76, %v79
    %v84 = vmul.f32 %v78, %v79
    %v85 = vld [vmem:[%s2] sm:$0x1]
    %v87 = vlaneseq
    %v88 = vshrl.u32 %v87, 7
    %v89 = vsub.s32 0, %v88
    %v90 = vrot.slane %v85, %v89
    %v92 = vmul.f32 %v80, %v90
    %v93 = vmul.f32 %v81, %v90
    %v94 = vmul.f32 %v82, %v90
    %v95 = vmul.f32 %v83, %v90
    %v96 = vmul.f32 %v84, %v90
    %v97 = vld [vmem:[%s3] sm:$0x1]
    %v99 = vlaneseq
    %v100 = vshrl.u32 %v99, 7
    %v101 = vsub.s32 0, %v100
    %v102 = vrot.slane %v97, %v101
    %v104 = vadd.f32 %v92, %v102
    %v105 = vadd.f32 %v93, %v102
    %v106 = vadd.f32 %v94, %v102
    %v107 = vadd.f32 %v95, %v102
    %v108 = vadd.f32 %v96, %v102
    %v109 = vmax.f32 %v104, 0.0
    %v110 = vmax.f32 %v105, 0.0
    %v111 = vmax.f32 %v106, 0.0
    %v112 = vmax.f32 %v107, 0.0
    %v113 = vmax.f32 %v108, 0.0
    %v114 = vld [vmem:[%s4] sm:$0x1]
    %v116 = vlaneseq
    %v117 = vshrl.u32 %v116, 7
    %v118 = vsub.s32 0, %v117
    %v119 = vrot.slane %v114, %v118
    %v121 = vmul.f32 %v109, %v119
    %v122 = vmul.f32 %v110, %v119
    %v123 = vmul.f32 %v111, %v119
    %v124 = vmul.f32 %v112, %v119
    %v125 = vmul.f32 %v113, %v119
    %vm126 = vcmask 130048
    %v127 = vsel %vm126, %v121, 0.0
    %128 = vadd.xlane.f32.xlu0 %v127
    %v129 = vpop.xlane.xlu0 %128
    %v130 = vsel %vm126, %v122, 0.0
    %131 = vadd.xlane.f32.xlu0 %v130
    %v132 = vpop.xlane.xlu0 %131
    %v133 = vsel %vm126, %v123, 0.0
    %134 = vadd.xlane.f32.xlu0 %v133
    %v135 = vpop.xlane.xlu0 %134
    %v136 = vsel %vm126, %v124, 0.0
    %137 = vadd.xlane.f32.xlu0 %v136
    %v138 = vpop.xlane.xlu0 %137
    %v139 = vsel %vm126, %v125, 0.0
    %140 = vadd.xlane.f32.xlu0 %v139
    %v141 = vpop.xlane.xlu0 %140
    %v142 = vld [vmem:[#allocation2] sm:$0x1]
    %v144 = vlaneseq
    %v145 = vshrl.u32 %v144, 7
    %v146 = vsub.s32 0, %v145
    %v147 = vrot.slane %v142, %v146
    %v149 = vadd.f32 %v129, %v147
    %v150 = vadd.f32 %v132, %v147
    %v151 = vadd.f32 %v135, %v147
    %v152 = vadd.f32 %v138, %v147
    %v153 = vadd.f32 %v141, %v147
    %v154 = vxor.u32 %v149, 2147483648
    %v155 = vxor.u32 %v150, 2147483648
    %v156 = vxor.u32 %v151, 2147483648
    %v157 = vxor.u32 %v152, 2147483648
    %v158 = vxor.u32 %v153, 2147483648
    %v159 = vmul.f32 %v154, 1.442695
    %v160 = vpow.pop %v159
    %v161 = vmul.f32 %v155, 1.442695
    %v162 = vpow.pop %v161
    %v163 = vmul.f32 %v156, 1.442695
    %v164 = vpow.pop %v163
    %v165 = vmul.f32 %v157, 1.442695
    %v166 = vpow.pop %v165
    %v167 = vmul.f32 %v158, 1.442695
    %v168 = vpow.pop %v167
    %v169 = vadd.f32 %v160, 1.0
    %v170 = vadd.f32 %v162, 1.0
    %v171 = vadd.f32 %v164, 1.0
    %v172 = vadd.f32 %v166, 1.0
    %v173 = vadd.f32 %v168, 1.0
    %v174 = vrcp.pop %v169
    %v175 = vmul.f32 1.0, %v174
    %v176 = vrcp.pop %v170
    %v177 = vmul.f32 1.0, %v176
    %v178 = vrcp.pop %v171
    %v179 = vmul.f32 1.0, %v178
    %v180 = vrcp.pop %v172
    %v181 = vmul.f32 1.0, %v180
    %v182 = vrcp.pop %v173
    %v183 = vmul.f32 1.0, %v182
    %v184 = vadd.f32 %v175, 1.0
    %v185 = vadd.f32 %v177, 1.0
    %v186 = vadd.f32 %v179, 1.0
    %v187 = vadd.f32 %v181, 1.0
    %v188 = vadd.f32 %v183, 1.0
    %190 = vset.pattern.permute.xlu0 0
    %191 = vperm.xlu0 %190, %v184
    %v192 = vpop.permute.xlu0 %191
    %195 = vset.pattern.permute.xlu0 0
    %196 = vperm.xlu0 %195, %v185
    %v197 = vpop.permute.xlu0 %196
    %200 = vset.pattern.permute.xlu0 0
    %201 = vperm.xlu0 %200, %v186
    %v202 = vpop.permute.xlu0 %201
    %205 = vset.pattern.permute.xlu0 0
    %206 = vperm.xlu0 %205, %v187
    %v207 = vpop.permute.xlu0 %206
    %210 = vset.pattern.permute.xlu0 0
    %211 = vperm.xlu0 %210, %v188
    %v212 = vpop.permute.xlu0 %211
    %v214 = vmul.f32 %v192, %v64
    %v215 = vmul.f32 %v197, %v65
    %v216 = vmul.f32 %v202, %v66
    %v217 = vmul.f32 %v207, %v67
    %v218 = vmul.f32 %v212, %v68
    %219 = vst [vmem:[#allocation8] sm:$0xff] %v214
    %220 = vst [vmem:[#allocation8 + $0x8] sm:$0xff] %v215
    %221 = vst [vmem:[#allocation8 + $0x10] sm:$0xff] %v216
    %222 = vst [vmem:[#allocation8 + $0x18] sm:$0xff] %v217
    %223 = vst [vmem:[#allocation8 + $0x20] sm:$0xff] %v218
    // Predicated region
    $region34: #{tpu_custom_call.1} parent=1 // pred_check
      _
    $region35: #{tpu_custom_call.1} parent=1 // pred_check_branch
      %225 = sbr.rel (0) target = $region37
    $region36: #{tpu_custom_call.1} parent=1 // pred_region
      %s227 = ssub.s32 640, 640
      %228 = vsyncadd [#allocation5], %s227
      %s229 = sshll.u32 [#allocation8], 4
      %s230 = int_to_ptr.vmem [resolvable:$true] %s229
      %235 = dma.vmem_to_hbm [thread:$0]  %s230, 640, %s6, [#allocation5], 128, 128, 8
    $region37: #{tpu_custom_call.1} parent=1 // pred_fallthru
      _
    // Predicated region
    $region38: #{tpu_custom_call.1} parent=1 // pred_check
      _
    $region39: #{tpu_custom_call.1} parent=1 // pred_check_branch
      %237 = sbr.rel (0) target = $region41
    $region40: #{tpu_custom_call.1} parent=1 // pred_region
      %238 = dma.done [#allocation5], 640
    $region41: #{tpu_custom_call.1} parent=1 // pred_fallthru
      _
    %239 = vsyncpa [#allocation4], 1
    %240 = vsyncpa [#allocation7], 1
    %241 = vsyncpa [#allocation5], 1

</llo_original>
